<compile_context>
chip_gen: v6e
topology: v6e:2x2x1
jax: 0.10.0
libtpu: 0.0.40
codegen_flags: <defaults>
</compile_context>

<pallas_src>
import functools

import jax
import jax.numpy as jnp
import numpy as np
from jax.experimental import pallas as pl
from jax.experimental.pallas import tpu as pltpu

# ---------------- model hyper-params (small, consistent with the module) ----
VOCAB_NUM = 50
EMBED_SIZE = 32                  # -> in_channels = 2 * 32 = 64
KERNEL_SIZES = (3, 4, 5)
NUM_CHANNELS = (16, 16, 16)      # sum = 48
NUM_CLASSES = 6
BATCH = 2
SEQ_LEN = 16

KMAX = max(KERNEL_SIZES)
C_TOTAL = sum(NUM_CHANNELS)
KW = KMAX * VOCAB_NUM            # shifted one-hot width (lane = j*V + v), 250
OUT_LANES = 128                  # lane-dense logits slab


def _textcnn_kernel(enc_ids_ref, wbig_ref, bias_ref, decw_ref, decb_ref,
                    out_ref, *, B, L, C, KW, KMAX, OUT_ROWS):
    """Fused (embed+conv) matmul + masked max-pool + bias/ReLU + decoder.

      enc_ids : (B*L, KMAX) int32  encoded shifted ids: j*V + id, or -1 (pad)
      wbig    : (KMAX*V, C) bf16   embedding table folded into conv taps
      bias    : (1, C)      f32    concat of conv biases
      decw    : (C, 128)    f32    decoder weight (lanes >= 6 are zero)
      decb    : (1, 128)    f32    decoder bias   (lanes >= 6 are zero)
      out     : (OUT_ROWS, 128) f32, logits in [0:B, 0:6]
    """
    BL = B * L

    # --- shifted one-hot over (BL, KMAX*V); int32 compares, bf16 MXU operand -
    ids = enc_ids_ref[...]                                    # (BL, KMAX) int32
    lane = jax.lax.broadcasted_iota(jnp.int32, (BL, KW), 1)
    hit = lane == ids[:, 0:1]
    for j in range(1, KMAX):
        hit = jnp.logical_or(hit, lane == ids[:, j:j + 1])
    onehot = hit.astype(jnp.float32).astype(jnp.bfloat16)     # exact 0/1

    # --- ONE matmul = embedding lookup + all conv branches & taps ------------
    conv = jnp.dot(onehot, wbig_ref[...],
                   preferred_element_type=jnp.float32)        # (BL, C) f32

    # --- in-kernel validity mask (pos <= L - k per branch) + global max pool -
    conv3 = conv.reshape(B, L, C)
    pos = jax.lax.broadcasted_iota(jnp.int32, (B, L, C), 1)
    chan = jax.lax.broadcasted_iota(jnp.int32, (1, 1, C), 2)
    maxpos = jnp.zeros((1, 1, C), jnp.int32)
    col = 0
    for k, c in zip(KERNEL_SIZES, NUM_CHANNELS):
        maxpos = jnp.where((chan >= col) & (chan < col + c), L - k, maxpos)
        col += c
    conv3 = jnp.where(pos <= maxpos, conv3, jnp.finfo(jnp.float32).min)
    pooled = jnp.max(conv3, axis=1)                           # (B, C)

    # bias + ReLU after the pool (bias is position-constant, ReLU monotonic)
    enc = jnp.maximum(pooled + bias_ref[...], 0.0)            # (B, C)

    # pad rows so the output store is a full (8, 128) unmasked vst
    if OUT_ROWS > B:
        enc = jnp.concatenate(
            [enc, jnp.zeros((OUT_ROWS - B, C), jnp.float32)], axis=0)

    # TODO(synk): nn.Dropout(0.5) is identity in eval mode; no RNG mask applied.
    out_ref[...] = jnp.dot(enc, decw_ref[...],
                           preferred_element_type=jnp.float32) + decb_ref[...]


def prepare_kernel_params(params):
    """One-time re-layout: fold embedding table into conv weights, pad decoder."""
    table = np.concatenate(
        [np.asarray(params["embedding"], np.float32),
         np.asarray(params["constant_embedding"], np.float32)],
        axis=1)                                               # (V, 2E)

    w_big = np.zeros((KW, C_TOTAL), np.float32)
    bias = np.zeros((1, C_TOTAL), np.float32)
    col = 0
    for i, (k, c) in enumerate(zip(KERNEL_SIZES, NUM_CHANNELS)):
        w = np.asarray(params[f"conv{i}_w"], np.float32)      # (c, 2E, k) torch
        for j in range(k):
            # rows [j*V, (j+1)*V): table @ w[:, :, j].T  -> (V, c)
            w_big[j * VOCAB_NUM:(j + 1) * VOCAB_NUM, col:col + c] = (
                table @ w[:, :, j].T)
        bias[0, col:col + c] = np.asarray(params[f"conv{i}_b"], np.float32)
        col += c

    dec_w = np.zeros((C_TOTAL, OUT_LANES), np.float32)
    dec_w[:, :NUM_CLASSES] = np.asarray(params["dec_w"], np.float32).T
    dec_b = np.zeros((1, OUT_LANES), np.float32)
    dec_b[0, :NUM_CLASSES] = np.asarray(params["dec_b"], np.float32)

    return dict(
        w_big=jnp.asarray(w_big, jnp.bfloat16),               # bf16 MXU operand
        bias=jnp.asarray(bias),
        dec_w=jnp.asarray(dec_w),
        dec_b=jnp.asarray(dec_b),
    )


def textcnn_forward(token_ids, prep):
    """token_ids: (B, L) int32.  prep: output of prepare_kernel_params."""
    B, L = token_ids.shape
    assert L >= KMAX, "sequence must be at least max(kernel_sizes)"
    out_rows = max(8, ((B + 7) // 8) * 8)

    # pre-shift token ids per tap and encode the tap index into the id:
    # enc[p, j] = j*V + id[p+j]  (same sequence), or -1 past the sequence end.
    ids = token_ids.astype(jnp.int32)
    idsp = jnp.concatenate(
        [ids, jnp.full((B, KMAX - 1), -1, jnp.int32)], axis=1)   # (B, L+KMAX-1)
    taps = [jnp.where(idsp[:, j:j + L] >= 0,
                      idsp[:, j:j + L] + j * VOCAB_NUM, -1)
            for j in range(KMAX)]
    enc_ids = jnp.stack(taps, axis=-1).reshape(B * L, KMAX)      # (B*L, KMAX)

    kernel = functools.partial(
        _textcnn_kernel, B=B, L=L, C=C_TOTAL, KW=KW, KMAX=KMAX,
        OUT_ROWS=out_rows)

    vmem = pl.BlockSpec(memory_space=pltpu.MemorySpace.VMEM)
    out = pl.pallas_call(
        kernel,
        out_shape=jax.ShapeDtypeStruct((out_rows, OUT_LANES), jnp.float32),
        in_specs=[vmem] * 5,
        out_specs=vmem,
    )(enc_ids, prep["w_big"], prep["bias"], prep["dec_w"], prep["dec_b"])
    return out[:B, :NUM_CLASSES]


def init_params(key):
    keys = jax.random.split(key, 4 + 2 * len(KERNEL_SIZES))
    params = {
        "embedding": 0.1 * jax.random.normal(
            keys[0], (VOCAB_NUM, EMBED_SIZE), jnp.float32),
        "constant_embedding": 0.1 * jax.random.normal(
            keys[1], (VOCAB_NUM, EMBED_SIZE), jnp.float32),
        "dec_w": 0.1 * jax.random.normal(
            keys[2], (NUM_CLASSES, C_TOTAL), jnp.float32),
        "dec_b": 0.1 * jax.random.normal(
            keys[3], (NUM_CLASSES,), jnp.float32),
    }
    for i, (k, c) in enumerate(zip(KERNEL_SIZES, NUM_CHANNELS)):
        params[f"conv{i}_w"] = 0.1 * jax.random.normal(
            keys[4 + 2 * i], (c, 2 * EMBED_SIZE, k), jnp.float32)
        params[f"conv{i}_b"] = 0.1 * jax.random.normal(
            keys[5 + 2 * i], (c,), jnp.float32)
    return params


def reference_forward(token_ids, params):
    """Pure-JAX reference mirroring the PyTorch forward (eval mode)."""
    emb = jnp.concatenate(
        [params["embedding"][token_ids],
         params["constant_embedding"][token_ids]], axis=-1)   # (B, L, 2E)
    feats = []
    for i, (k, c) in enumerate(zip(KERNEL_SIZES, NUM_CHANNELS)):
        w = params[f"conv{i}_w"]                              # (c, 2E, k)
        b = params[f"conv{i}_b"]
        l_out = emb.shape[1] - k + 1
        conv = jnp.zeros((emb.shape[0], l_out, c), jnp.float32)
        for j in range(k):
            conv = conv + jnp.einsum("ble,ce->blc",
                                     emb[:, j:j + l_out, :], w[:, :, j])
        conv = jax.nn.relu(conv + b)
        feats.append(jnp.max(conv, axis=1))
    enc = jnp.concatenate(feats, axis=1)
    return enc @ params["dec_w"].T + params["dec_b"]


if __name__ == "__main__":
    key = jax.random.PRNGKey(0)
    pkey, dkey = jax.random.split(key)
    params = init_params(pkey)
    token_ids = jax.random.randint(dkey, (BATCH, SEQ_LEN), 0, VOCAB_NUM,
                                   dtype=jnp.int32)

    prep = prepare_kernel_params(params)        # one-time weight re-layout
    fwd = jax.jit(textcnn_forward)              # fuse id-shift ops + dispatch
    out = jax.block_until_ready(fwd(token_ids, prep))

    ref = reference_forward(token_ids, params)
    np.testing.assert_allclose(np.asarray(out), np.asarray(ref),
                               rtol=2e-2, atol=2e-3)
    print("KERNEL_OK")
</pallas_src>

<mosaic_0001>
module attributes {stable_mosaic.version = 11 : i64} {
  func.func @_textcnn_kernel(%arg0: memref<32x5xi32, #tpu.memory_space<vmem>>, %arg1: memref<250x48xbf16, #tpu.memory_space<vmem>>, %arg2: memref<1x48xf32, #tpu.memory_space<vmem>>, %arg3: memref<48x128xf32, #tpu.memory_space<vmem>>, %arg4: memref<1x128xf32, #tpu.memory_space<vmem>>, %arg5: memref<8x128xf32, #tpu.memory_space<vmem>>) attributes {dimension_semantics = [], scalar_prefetch = 0 : i64, scratch_operands = 0 : i64, tpu.core_type = #tpu.core_type<tc>} {
    %c0 = arith.constant 0 : index
    %c0_0 = arith.constant 0 : index
    %0 = vector.load %arg0[%c0, %c0_0] : memref<32x5xi32, #tpu.memory_space<vmem>>, vector<32x5xi32>
    %1 = tpu.iota {dimensions = array<i32: 1>} : vector<32x250xi32>
    %2 = vector.extract_strided_slice %0 {offsets = [0, 0], sizes = [32, 1], strides = [1, 1]} : vector<32x5xi32> to vector<32x1xi32>
    %3 = vector.broadcast %2 : vector<32x1xi32> to vector<32x250xi32>
    %4 = arith.cmpi eq, %1, %3 : vector<32x250xi32>
    %5 = vector.extract_strided_slice %0 {offsets = [0, 1], sizes = [32, 1], strides = [1, 1]} : vector<32x5xi32> to vector<32x1xi32>
    %6 = vector.broadcast %5 : vector<32x1xi32> to vector<32x250xi32>
    %7 = arith.cmpi eq, %1, %6 : vector<32x250xi32>
    %8 = arith.ori %4, %7 : vector<32x250xi1>
    %9 = vector.extract_strided_slice %0 {offsets = [0, 2], sizes = [32, 1], strides = [1, 1]} : vector<32x5xi32> to vector<32x1xi32>
    %10 = vector.broadcast %9 : vector<32x1xi32> to vector<32x250xi32>
    %11 = arith.cmpi eq, %1, %10 : vector<32x250xi32>
    %12 = arith.ori %8, %11 : vector<32x250xi1>
    %13 = vector.extract_strided_slice %0 {offsets = [0, 3], sizes = [32, 1], strides = [1, 1]} : vector<32x5xi32> to vector<32x1xi32>
    %14 = vector.broadcast %13 : vector<32x1xi32> to vector<32x250xi32>
    %15 = arith.cmpi eq, %1, %14 : vector<32x250xi32>
    %16 = arith.ori %12, %15 : vector<32x250xi1>
    %17 = vector.extract_strided_slice %0 {offsets = [0, 4], sizes = [32, 1], strides = [1, 1]} : vector<32x5xi32> to vector<32x1xi32>
    %18 = vector.broadcast %17 : vector<32x1xi32> to vector<32x250xi32>
    %19 = arith.cmpi eq, %1, %18 : vector<32x250xi32>
    %20 = arith.ori %16, %19 : vector<32x250xi1>
    %21 = arith.extui %20 : vector<32x250xi1> to vector<32x250xi32>
    %22 = arith.sitofp %21 : vector<32x250xi32> to vector<32x250xf32>
    %23 = arith.truncf %22 : vector<32x250xf32> to vector<32x250xbf16>
    %c0_1 = arith.constant 0 : index
    %c0_2 = arith.constant 0 : index
    %24 = vector.load %arg1[%c0_1, %c0_2] : memref<250x48xbf16, #tpu.memory_space<vmem>>, vector<250x48xbf16>
    %cst = arith.constant dense<0.000000e+00> : vector<32x48xf32>
    %25 = tpu.matmul %23, %24, %cst {dimension_numbers = #tpu.dot_dimension_numbers<[1], [0], [0], [1], [0, 0, 1, 1], [], []>} : vector<32x250xbf16>, vector<250x48xbf16>, vector<32x48xf32> -> vector<32x48xf32>
    %26 = vector.shape_cast %25 : vector<32x48xf32> to vector<2x16x48xf32>
    %27 = tpu.iota {dimensions = array<i32: 1>} : vector<2x16x48xi32>
    %28 = tpu.iota {dimensions = array<i32: 2>} : vector<1x1x48xi32>
    %c0_i32 = arith.constant 0 : i32
    %29 = vector.broadcast %c0_i32 : i32 to vector<1x1x48xi32>
    %c0_i32_3 = arith.constant 0 : i32
    %30 = vector.broadcast %c0_i32_3 : i32 to vector<1x1x48xi32>
    %31 = arith.cmpi sge, %28, %30 : vector<1x1x48xi32>
    %c16_i32 = arith.constant 16 : i32
    %32 = vector.broadcast %c16_i32 : i32 to vector<1x1x48xi32>
    %33 = arith.cmpi slt, %28, %32 : vector<1x1x48xi32>
    %34 = arith.andi %31, %33 : vector<1x1x48xi1>
    %c13_i32 = arith.constant 13 : i32
    %35 = vector.broadcast %c13_i32 : i32 to vector<1x1x48xi32>
    %36 = arith.select %34, %35, %29 : vector<1x1x48xi1>, vector<1x1x48xi32>
    %c16_i32_4 = arith.constant 16 : i32
    %37 = vector.broadcast %c16_i32_4 : i32 to vector<1x1x48xi32>
    %38 = arith.cmpi sge, %28, %37 : vector<1x1x48xi32>
    %c32_i32 = arith.constant 32 : i32
    %39 = vector.broadcast %c32_i32 : i32 to vector<1x1x48xi32>
    %40 = arith.cmpi slt, %28, %39 : vector<1x1x48xi32>
    %41 = arith.andi %38, %40 : vector<1x1x48xi1>
    %c12_i32 = arith.constant 12 : i32
    %42 = vector.broadcast %c12_i32 : i32 to vector<1x1x48xi32>
    %43 = arith.select %41, %42, %36 : vector<1x1x48xi1>, vector<1x1x48xi32>
    %c32_i32_5 = arith.constant 32 : i32
    %44 = vector.broadcast %c32_i32_5 : i32 to vector<1x1x48xi32>
    %45 = arith.cmpi sge, %28, %44 : vector<1x1x48xi32>
    %c48_i32 = arith.constant 48 : i32
    %46 = vector.broadcast %c48_i32 : i32 to vector<1x1x48xi32>
    %47 = arith.cmpi slt, %28, %46 : vector<1x1x48xi32>
    %48 = arith.andi %45, %47 : vector<1x1x48xi1>
    %c11_i32 = arith.constant 11 : i32
    %49 = vector.broadcast %c11_i32 : i32 to vector<1x1x48xi32>
    %50 = arith.select %48, %49, %43 : vector<1x1x48xi1>, vector<1x1x48xi32>
    %51 = vector.broadcast %50 : vector<1x1x48xi32> to vector<2x16x48xi32>
    %52 = arith.cmpi sle, %27, %51 : vector<2x16x48xi32>
    %cst_6 = arith.constant -3.40282347E+38 : f32
    %53 = vector.broadcast %cst_6 : f32 to vector<2x16x48xf32>
    %54 = arith.select %52, %26, %53 : vector<2x16x48xi1>, vector<2x16x48xf32>
    %cst_7 = arith.constant dense<0xFF800000> : vector<2x48xf32>
    %55 = vector.multi_reduction <maximumf>, %54, %cst_7 [1] : vector<2x16x48xf32> to vector<2x48xf32>
    %c0_8 = arith.constant 0 : index
    %c0_9 = arith.constant 0 : index
    %56 = vector.load %arg2[%c0_8, %c0_9] : memref<1x48xf32, #tpu.memory_space<vmem>>, vector<1x48xf32>
    %57 = vector.broadcast %56 : vector<1x48xf32> to vector<2x48xf32>
    %58 = arith.addf %55, %57 : vector<2x48xf32>
    %cst_10 = arith.constant 0.000000e+00 : f32
    %59 = vector.broadcast %cst_10 : f32 to vector<2x48xf32>
    %60 = arith.maximumf %58, %59 : vector<2x48xf32>
    %cst_11 = arith.constant 0.000000e+00 : f32
    %61 = vector.broadcast %cst_11 : f32 to vector<6x48xf32>
    %62 = tpu.concatenate %60, %61 in 0 : vector<2x48xf32>, vector<6x48xf32> -> vector<8x48xf32>
    %c0_12 = arith.constant 0 : index
    %c0_13 = arith.constant 0 : index
    %63 = vector.load %arg3[%c0_12, %c0_13] : memref<48x128xf32, #tpu.memory_space<vmem>>, vector<48x128xf32>
    %cst_14 = arith.constant dense<0.000000e+00> : vector<8x128xf32>
    %64 = tpu.matmul %62, %63, %cst_14 {dimension_numbers = #tpu.dot_dimension_numbers<[1], [0], [0], [1], [0, 0, 1, 1], [], []>} : vector<8x48xf32>, vector<48x128xf32>, vector<8x128xf32> -> vector<8x128xf32>
    %c0_15 = arith.constant 0 : index
    %c0_16 = arith.constant 0 : index
    %65 = vector.load %arg4[%c0_15, %c0_16] : memref<1x128xf32, #tpu.memory_space<vmem>>, vector<1x128xf32>
    %66 = vector.broadcast %65 : vector<1x128xf32> to vector<8x128xf32>
    %67 = arith.addf %64, %66 : vector<8x128xf32>
    %c0_17 = arith.constant 0 : index
    %c0_18 = arith.constant 0 : index
    %68 = vector.load %arg5[%c0_17, %c0_18] : memref<8x128xf32, #tpu.memory_space<vmem>>, vector<8x128xf32>
    tpu.vector_store %arg5[%c0_17, %c0_18], %67 {strides = array<i32>} : memref<8x128xf32, #tpu.memory_space<vmem>>, vector<8x128xf32>,
    return
  }
}

</mosaic_0001>

<llo_original>
// kernel: textcnn_forward.1
$region0: #{textcnn_forward.1}
  #allocation0 [shape = 'u32[]', space=smem, size = 0x4, offset = 0x4, fixed_abs, tag = 'smem constant byte address 0x4 - core index']
  #allocation1 [shape = 'u32[144,128]{1,0:T(1,128)}', space=vmem, size = 0x12000, scoped, tag = 'internal scratch']
  %s0 = inlined_call_operand.vmem [shape: s32[32,5], index: 0, kind: input, shape index: {}]
  %s1 = inlined_call_operand.vmem [shape: bf16[250,48], index: 1, kind: input, shape index: {}]
  %s2 = inlined_call_operand.vmem [shape: f32[1,48], index: 2, kind: input, shape index: {}]
  %s3 = inlined_call_operand.vmem [shape: f32[48,128], index: 3, kind: input, shape index: {}]
  %s4 = inlined_call_operand.vmem [shape: f32[1,128], index: 4, kind: input, shape index: {}]
  %s5 = inlined_call_operand.vmem [shape: f32[8,128], index: 5, kind: output, shape index: {}]
  %s6 = sld [smem:[#allocation0]]
  $region30: #{textcnn_forward.1} parent=0
    _
  %s8 = ssub.s32 1, %s6
  %s9 = scalar_select 0, %s8, %s6
  // Predicated region
  $region2: #{textcnn_forward.1} parent=0 // pred_check
    _
  $region3: #{textcnn_forward.1} parent=0 // pred_check_branch
    %11 = sbr.rel (0) target = $region5
  $region4: #{textcnn_forward.1} parent=0 // pred_region
    _
  $region5: #{textcnn_forward.1} parent=0 // pred_fallthru
    _
  // Predicated region
  $region6: #{textcnn_forward.1} parent=0 // pred_check
    _
  $region7: #{textcnn_forward.1} parent=0 // pred_check_branch
    %13 = sbr.rel (0) target = $region9
  $region8: #{textcnn_forward.1} parent=0 // pred_region
    _
  $region9: #{textcnn_forward.1} parent=0 // pred_fallthru
    _
  // Predicated region
  $region10: #{textcnn_forward.1} parent=0 // pred_check
    _
  $region11: #{textcnn_forward.1} parent=0 // pred_check_branch
    %15 = sbr.rel (0) target = $region13
  $region12: #{textcnn_forward.1} parent=0 // pred_region
    _
  $region13: #{textcnn_forward.1} parent=0 // pred_fallthru
    _
  // Predicated region
  $region14: #{textcnn_forward.1} parent=0 // pred_check
    _
  $region15: #{textcnn_forward.1} parent=0 // pred_check_branch
    %17 = sbr.rel (0) target = $region17
  $region16: #{textcnn_forward.1} parent=0 // pred_region
    _
  $region17: #{textcnn_forward.1} parent=0 // pred_fallthru
    _
  // Predicated region
  $region18: #{textcnn_forward.1} parent=0 // pred_check
    _
  $region19: #{textcnn_forward.1} parent=0 // pred_check_branch
    %19 = sbr.rel (0) target = $region21
  $region20: #{textcnn_forward.1} parent=0 // pred_region
    _
  $region21: #{textcnn_forward.1} parent=0 // pred_fallthru
    _
  %v21 = vld [vmem:[%s0] sm:$0xff]
  %v22 = vld [vmem:[%s0 + $0x8] sm:$0xff]
  %v23 = vld [vmem:[%s0 + $0x10] sm:$0xff]
  %v24 = vld [vmem:[%s0 + $0x18] sm:$0xff]
  %v25 = vlaneseq
  %v26 = vand.u32 %v25, 127
  %v27 = vadd.s32 %v26, 128
  %28 = vset.pattern.permute.xlu0 0
  %29 = vperm.xlu0 %28, %v21
  %v30 = vpop.permute.xlu0 %29
  %31 = vset.pattern.permute.xlu0 0
  %32 = vperm.xlu0 %31, %v22
  %v33 = vpop.permute.xlu0 %32
  %34 = vset.pattern.permute.xlu0 0
  %35 = vperm.xlu0 %34, %v23
  %v36 = vpop.permute.xlu0 %35
  %37 = vset.pattern.permute.xlu0 0
  %38 = vperm.xlu0 %37, %v24
  %v39 = vpop.permute.xlu0 %38
  %vm40 = vcmp.eq.s32.totalorder %v26, %v30
  %vm41 = vcmp.eq.s32.totalorder %v27, %v30
  %vm42 = vcmp.eq.s32.totalorder %v26, %v33
  %vm43 = vcmp.eq.s32.totalorder %v27, %v33
  %vm44 = vcmp.eq.s32.totalorder %v26, %v36
  %vm45 = vcmp.eq.s32.totalorder %v27, %v36
  %vm46 = vcmp.eq.s32.totalorder %v26, %v39
  %vm47 = vcmp.eq.s32.totalorder %v27, %v39
  %48 = vset.pattern.permute.xlu0 1
  %49 = vperm.xlu0 %48, %v21
  %v50 = vpop.permute.xlu0 %49
  %51 = vset.pattern.permute.xlu0 1
  %52 = vperm.xlu0 %51, %v22
  %v53 = vpop.permute.xlu0 %52
  %54 = vset.pattern.permute.xlu0 1
  %55 = vperm.xlu0 %54, %v23
  %v56 = vpop.permute.xlu0 %55
  %57 = vset.pattern.permute.xlu0 1
  %58 = vperm.xlu0 %57, %v24
  %v59 = vpop.permute.xlu0 %58
  %vm60 = vcmp.eq.s32.totalorder %v26, %v50
  %vm61 = vcmp.eq.s32.totalorder %v27, %v50
  %vm62 = vcmp.eq.s32.totalorder %v26, %v53
  %vm63 = vcmp.eq.s32.totalorder %v27, %v53
  %vm64 = vcmp.eq.s32.totalorder %v26, %v56
  %vm65 = vcmp.eq.s32.totalorder %v27, %v56
  %vm66 = vcmp.eq.s32.totalorder %v26, %v59
  %vm67 = vcmp.eq.s32.totalorder %v27, %v59
  %vm68 = vmor %vm40, %vm60
  %vm69 = vmor %vm41, %vm61
  %vm70 = vmor %vm42, %vm62
  %vm71 = vmor %vm43, %vm63
  %vm72 = vmor %vm44, %vm64
  %vm73 = vmor %vm45, %vm65
  %vm74 = vmor %vm46, %vm66
  %vm75 = vmor %vm47, %vm67
  %76 = vset.pattern.permute.xlu0 2
  %77 = vperm.xlu0 %76, %v21
  %v78 = vpop.permute.xlu0 %77
  %79 = vset.pattern.permute.xlu0 2
  %80 = vperm.xlu0 %79, %v22
  %v81 = vpop.permute.xlu0 %80
  %82 = vset.pattern.permute.xlu0 2
  %83 = vperm.xlu0 %82, %v23
  %v84 = vpop.permute.xlu0 %83
  %85 = vset.pattern.permute.xlu0 2
  %86 = vperm.xlu0 %85, %v24
  %v87 = vpop.permute.xlu0 %86
  %vm88 = vcmp.eq.s32.totalorder %v26, %v78
  %vm89 = vcmp.eq.s32.totalorder %v27, %v78
  %vm90 = vcmp.eq.s32.totalorder %v26, %v81
  %vm91 = vcmp.eq.s32.totalorder %v27, %v81
  %vm92 = vcmp.eq.s32.totalorder %v26, %v84
  %vm93 = vcmp.eq.s32.totalorder %v27, %v84
  %vm94 = vcmp.eq.s32.totalorder %v26, %v87
  %vm95 = vcmp.eq.s32.totalorder %v27, %v87
  %vm96 = vmor %vm68, %vm88
  %vm97 = vmor %vm69, %vm89
  %vm98 = vmor %vm70, %vm90
  %vm99 = vmor %vm71, %vm91
  %vm100 = vmor %vm72, %vm92
  %vm101 = vmor %vm73, %vm93
  %vm102 = vmor %vm74, %vm94
  %vm103 = vmor %vm75, %vm95
  %104 = vset.pattern.permute.xlu0 3
  %105 = vperm.xlu0 %104, %v21
  %v106 = vpop.permute.xlu0 %105
  %107 = vset.pattern.permute.xlu0 3
  %108 = vperm.xlu0 %107, %v22
  %v109 = vpop.permute.xlu0 %108
  %110 = vset.pattern.permute.xlu0 3
  %111 = vperm.xlu0 %110, %v23
  %v112 = vpop.permute.xlu0 %111
  %113 = vset.pattern.permute.xlu0 3
  %114 = vperm.xlu0 %113, %v24
  %v115 = vpop.permute.xlu0 %114
  %vm116 = vcmp.eq.s32.totalorder %v26, %v106
  %vm117 = vcmp.eq.s32.totalorder %v27, %v106
  %vm118 = vcmp.eq.s32.totalorder %v26, %v109
  %vm119 = vcmp.eq.s32.totalorder %v27, %v109
  %vm120 = vcmp.eq.s32.totalorder %v26, %v112
  %vm121 = vcmp.eq.s32.totalorder %v27, %v112
  %vm122 = vcmp.eq.s32.totalorder %v26, %v115
  %vm123 = vcmp.eq.s32.totalorder %v27, %v115
  %vm124 = vmor %vm96, %vm116
  %vm125 = vmor %vm97, %vm117
  %vm126 = vmor %vm98, %vm118
  %vm127 = vmor %vm99, %vm119
  %vm128 = vmor %vm100, %vm120
  %vm129 = vmor %vm101, %vm121
  %vm130 = vmor %vm102, %vm122
  %vm131 = vmor %vm103, %vm123
  %132 = vset.pattern.permute.xlu0 4
  %133 = vperm.xlu0 %132, %v21
  %v134 = vpop.permute.xlu0 %133
  %135 = vset.pattern.permute.xlu0 4
  %136 = vperm.xlu0 %135, %v22
  %v137 = vpop.permute.xlu0 %136
  %138 = vset.pattern.permute.xlu0 4
  %139 = vperm.xlu0 %138, %v23
  %v140 = vpop.permute.xlu0 %139
  %141 = vset.pattern.permute.xlu0 4
  %142 = vperm.xlu0 %141, %v24
  %v143 = vpop.permute.xlu0 %142
  %vm144 = vcmp.eq.s32.totalorder %v26, %v134
  %vm145 = vcmp.eq.s32.totalorder %v27, %v134
  %vm146 = vcmp.eq.s32.totalorder %v26, %v137
  %vm147 = vcmp.eq.s32.totalorder %v27, %v137
  %vm148 = vcmp.eq.s32.totalorder %v26, %v140
  %vm149 = vcmp.eq.s32.totalorder %v27, %v140
  %vm150 = vcmp.eq.s32.totalorder %v26, %v143
  %vm151 = vcmp.eq.s32.totalorder %v27, %v143
  %vm152 = vmor %vm124, %vm144
  %vm153 = vmor %vm125, %vm145
  %vm154 = vmor %vm126, %vm146
  %vm155 = vmor %vm127, %vm147
  %vm156 = vmor %vm128, %vm148
  %vm157 = vmor %vm129, %vm149
  %vm158 = vmor %vm130, %vm150
  %vm159 = vmor %vm131, %vm151
  %v160 = vsel %vm152, 1, 0
  %v161 = vsel %vm153, 1, 0
  %v162 = vsel %vm154, 1, 0
  %v163 = vsel %vm155, 1, 0
  %v164 = vsel %vm156, 1, 0
  %v165 = vsel %vm157, 1, 0
  %v166 = vsel %vm158, 1, 0
  %v167 = vsel %vm159, 1, 0
  %v168 = vcvt.s32.f32 %v160
  %v169 = vcvt.s32.f32 %v161
  %v170 = vcvt.s32.f32 %v162
  %v171 = vcvt.s32.f32 %v163
  %v172 = vcvt.s32.f32 %v164
  %v173 = vcvt.s32.f32 %v165
  %v174 = vcvt.s32.f32 %v166
  %v175 = vcvt.s32.f32 %v167
  %v176 = vpack.c.bf16 %v170, %v168
  %v177 = vpack.c.bf16 %v171, %v169
  %v178 = vpack.c.bf16 %v174, %v172
  %v179 = vpack.c.bf16 %v175, %v173
  %v180 = vld [vmem:[%s1] sm:$0xf]
  %v181 = vld [vmem:[%s1 + $0x4] sm:$0xf]
  %v182 = vld [vmem:[%s1 + $0x8] sm:$0xf]
  %v183 = vld [vmem:[%s1 + $0xc] sm:$0xf]
  %v184 = vld [vmem:[%s1 + $0x10] sm:$0xf]
  %v185 = vld [vmem:[%s1 + $0x14] sm:$0xf]
  %v186 = vld [vmem:[%s1 + $0x18] sm:$0xf]
  %v187 = vld [vmem:[%s1 + $0x1c] sm:$0xf]
  %v188 = vld [vmem:[%s1 + $0x20] sm:$0xf]
  %v189 = vld [vmem:[%s1 + $0x24] sm:$0xf]
  %v190 = vld [vmem:[%s1 + $0x28] sm:$0xf]
  %v191 = vld [vmem:[%s1 + $0x2c] sm:$0xf]
  %v192 = vld [vmem:[%s1 + $0x30] sm:$0xf]
  %v193 = vld [vmem:[%s1 + $0x34] sm:$0xf]
  %v194 = vld [vmem:[%s1 + $0x38] sm:$0xf]
  %v195 = vld [vmem:[%s1 + $0x3c] sm:$0xf]
  %v196 = vld [vmem:[%s1 + $0x40] sm:$0xf]
  %v197 = vld [vmem:[%s1 + $0x44] sm:$0xf]
  %v198 = vld [vmem:[%s1 + $0x48] sm:$0xf]
  %v199 = vld [vmem:[%s1 + $0x4c] sm:$0xf]
  %v200 = vld [vmem:[%s1 + $0x50] sm:$0xf]
  %v201 = vld [vmem:[%s1 + $0x54] sm:$0xf]
  %v202 = vld [vmem:[%s1 + $0x58] sm:$0xf]
  %v203 = vld [vmem:[%s1 + $0x5c] sm:$0xf]
  %v204 = vld [vmem:[%s1 + $0x60] sm:$0xf]
  %v205 = vld [vmem:[%s1 + $0x64] sm:$0xf]
  %v206 = vld [vmem:[%s1 + $0x68] sm:$0xf]
  %v207 = vld [vmem:[%s1 + $0x6c] sm:$0xf]
  %v208 = vld [vmem:[%s1 + $0x70] sm:$0xf]
  %v209 = vld [vmem:[%s1 + $0x74] sm:$0xf]
  %v210 = vld [vmem:[%s1 + $0x78] sm:$0xf]
  %v211 = vld [vmem:[%s1 + $0x7c] sm:$0x1]
  %v244 = vunpack.c.l.b16 %v180
  %v245 = vunpack.c.l.b16 %v181
  %v246 = vunpack.c.l.b16 %v182
  %v247 = vunpack.c.l.b16 %v183
  %v248 = vunpack.c.l.b16 %v184
  %v249 = vunpack.c.l.b16 %v185
  %v250 = vunpack.c.l.b16 %v186
  %v251 = vunpack.c.l.b16 %v187
  %v252 = vunpack.c.l.b16 %v188
  %v253 = vunpack.c.l.b16 %v189
  %v254 = vunpack.c.l.b16 %v190
  %v255 = vunpack.c.l.b16 %v191
  %v256 = vunpack.c.l.b16 %v192
  %v257 = vunpack.c.l.b16 %v193
  %v258 = vunpack.c.l.b16 %v194
  %v259 = vunpack.c.l.b16 %v195
  %v260 = vunpack.c.l.b16 %v196
  %v261 = vunpack.c.l.b16 %v197
  %v262 = vunpack.c.l.b16 %v198
  %v263 = vunpack.c.l.b16 %v199
  %v264 = vunpack.c.l.b16 %v200
  %v265 = vunpack.c.l.b16 %v201
  %v266 = vunpack.c.l.b16 %v202
  %v267 = vunpack.c.l.b16 %v203
  %v268 = vunpack.c.l.b16 %v204
  %v269 = vunpack.c.l.b16 %v205
  %v270 = vunpack.c.l.b16 %v206
  %v271 = vunpack.c.l.b16 %v207
  %v272 = vunpack.c.l.b16 %v208
  %v273 = vunpack.c.l.b16 %v209
  %v274 = vunpack.c.l.b16 %v210
  %v275 = vunpack.c.l.b16 %v211
  %v276 = vpack.c.b16 %v245, %v244
  %v277 = vpack.c.b16 %v247, %v246
  %v278 = vpack.c.b16 %v249, %v248
  %v279 = vpack.c.b16 %v251, %v250
  %v280 = vpack.c.b16 %v253, %v252
  %v281 = vpack.c.b16 %v255, %v254
  %v282 = vpack.c.b16 %v257, %v256
  %v283 = vpack.c.b16 %v259, %v258
  %v284 = vpack.c.b16 %v261, %v260
  %v285 = vpack.c.b16 %v263, %v262
  %v286 = vpack.c.b16 %v265, %v264
  %v287 = vpack.c.b16 %v267, %v266
  %v288 = vpack.c.b16 %v269, %v268
  %v289 = vpack.c.b16 %v271, %v270
  %v290 = vpack.c.b16 %v273, %v272
  %v291 = vpack.c.b16 %v275, %v274
  %vm307 = vcmask 998400
  %v309 = vsel %vm307, %v177, 0
  %v312 = vsel %vm307, %v179, 0
  %vm314 = vcmask 1044480
  %v316 = vsel %vm314, %v291, 0
  %318 = vmatprep.subr.bf16.mxu0 0
  %319 = vmatpush1.bf16.msra.mxu0 %v283
  %320 = vmatprep.subr.bf16.mxu0 0
  %321 = vmatpush1.bf16.msra.mxu0 %v282
  %322 = vmatprep.subr.bf16.mxu0 0
  %323 = vmatpush1.bf16.msra.mxu0 %v281
  %324 = vmatprep.subr.bf16.mxu0 0
  %325 = vmatpush1.bf16.msra.mxu0 %v280
  %326 = vmatprep.subr.bf16.mxu0 0
  %327 = vmatpush1.bf16.msra.mxu0 %v279
  %328 = vmatprep.subr.bf16.mxu0 0
  %329 = vmatpush1.bf16.msra.mxu0 %v278
  %330 = vmatprep.subr.bf16.mxu0 0
  %331 = vmatpush1.bf16.msra.mxu0 %v277
  %332 = vmatprep.subr.bf16.mxu0 0
  %333 = vmatpush1.bf16.msra.mxu0 %v276
  %334 = vmatprep.subr.bf16.mxu0 0
  %335 = vmatpush2.bf16.msra.mxu0 %v316
  %336 = vmatprep.subr.bf16.mxu0 0
  %337 = vmatpush2.bf16.msra.mxu0 %v290
  %338 = vmatprep.subr.bf16.mxu0 0
  %339 = vmatpush2.bf16.msra.mxu0 %v289
  %340 = vmatprep.subr.bf16.mxu0 0
  %341 = vmatpush2.bf16.msra.mxu0 %v288
  %342 = vmatprep.subr.bf16.mxu0 0
  %343 = vmatpush2.bf16.msra.mxu0 %v287
  %344 = vmatprep.subr.bf16.mxu0 0
  %345 = vmatpush2.bf16.msra.mxu0 %v286
  %346 = vmatprep.subr.bf16.mxu0 0
  %347 = vmatpush2.bf16.msra.mxu0 %v285
  %348 = vmatprep.subr.bf16.mxu0 0
  %349 = vmatpush2.bf16.msra.mxu0 %v284
  %350 = vmatprep.mubr.bf16.mxu0 %v309
  %351 = vmatmul.mubr.bf16.gmra.mxu0 %v176
  %v352 = vpop.f32.mrf.mxu0
  %v353 = vadd.f32 0.0, %v352
  %v354 = vpop.f32.mrf.mxu0
  %v355 = vpop.f32.mrf.mxu0
  %v356 = vadd.f32 0.0, %v355
  %v357 = vpop.f32.mrf.mxu0
  %358 = vmatprep.mubr.bf16.mxu0 %v312
  %359 = vmatmul.mubr.bf16.gmra.mxu0 %v178
  %v360 = vpop.f32.mrf.mxu0
  %v361 = vadd.f32 0.0, %v360
  %v362 = vpop.f32.mrf.mxu0
  %v363 = vpop.f32.mrf.mxu0
  %v364 = vadd.f32 0.0, %v363
  %v365 = vpop.f32.mrf.mxu0
  %366 = vdwg.mxu0
  %v367 = vlaneseq
  %v368 = vshrl.u32 %v367, 7
  %v369 = vadd.s32 %v368, 8
  %vm370 = vcmp.ge.s32.totalorder %v26, 0
  %vm371 = vcmp.lt.s32.totalorder %v26, 16
  %vm372 = vmand %vm370, %vm371
  %v373 = vsel %vm372, 13, 0
  %vm374 = vcmp.ge.s32.totalorder %v26, 16
  %vm375 = vcmp.lt.s32.totalorder %v26, 32
  %vm376 = vmand %vm374, %vm375
  %v377 = vsel %vm376, 12, %v373
  %vm378 = vcmp.ge.s32.totalorder %v26, 32
  %vm379 = vcmp.lt.s32.totalorder %v26, 48
  %vm380 = vmand %vm378, %vm379
  %v381 = vsel %vm380, 11, %v377
  %vm382 = vcmp.le.s32.totalorder %v368, %v381
  %vm383 = vcmp.le.s32.totalorder %v369, %v381
  %v384 = vsel %vm382, %v353, -3.4028235e+38
  %v385 = vsel %vm383, %v356, -3.4028235e+38
  %v386 = vsel %vm382, %v361, -3.4028235e+38
  %v387 = vsel %vm383, %v364, -3.4028235e+38
  %vm388 = vcmask 392192
  %v389 = vsel %vm388, %v384, -inf
  %v390 = vsel %vm388, %v385, -inf
  %v391 = vmax.f32 %v389, %v390
  %v392 = vrot.slane %v391, 4
  %v393 = vmax.f32 %v391, %v392
  %v394 = vrot.slane %v393, 2
  %v395 = vmax.f32 %v393, %v394
  %v396 = vrot.slane %v395, 1
  %v397 = vmax.f32 %v395, %v396
  %v398 = vsel %vm388, %v386, -inf
  %v399 = vsel %vm388, %v387, -inf
  %v400 = vmax.f32 %v398, %v399
  %v401 = vrot.slane %v400, 4
  %v402 = vmax.f32 %v400, %v401
  %v403 = vrot.slane %v402, 2
  %v404 = vmax.f32 %v402, %v403
  %v405 = vrot.slane %v404, 1
  %v406 = vmax.f32 %v404, %v405
  %v407 = vld [vmem:[%s2] sm:$0x1]
  %v409 = vlaneseq
  %v410 = vshrl.u32 %v409, 7
  %v411 = vsub.s32 0, %v410
  %v412 = vrot.slane %v407, %v411
  %v414 = vadd.f32 %v397, %v412
  %v415 = vadd.f32 %v406, %v412
  %v416 = vmax.f32 %v414, 0.0
  %v417 = vmax.f32 %v415, 0.0
  %v420 = vrot.slane %v417, 7
  %vm421 = vcmask 1041409
  %v422 = vsel %vm421, %v420, %v416
  %vm424 = vcmask 1041408
  %v425 = vsel %vm424, %v422, 0.0
  %v426 = vld [vmem:[%s3] sm:$0xff]
  %v427 = vld [vmem:[%s3 + $0x8] sm:$0xff]
  %v428 = vld [vmem:[%s3 + $0x10] sm:$0xff]
  %v429 = vld [vmem:[%s3 + $0x18] sm:$0xff]
  %v430 = vld [vmem:[%s3 + $0x20] sm:$0xff]
  %v431 = vld [vmem:[%s3 + $0x28] sm:$0xff]
  %v432 = vld [vmem:[%s4] sm:$0x1]
  %v434 = vlaneseq
  %v435 = vshrl.u32 %v434, 7
  %v436 = vsub.s32 0, %v435
  %v437 = vrot.slane %v432, %v436
  %v440 = vsel %vm388, %v425, 0
  %442 = vmatprep.subr.mxu0 0.0
  %443 = vmatpush1.msra.mxu0 0.0
  %444 = vmatprep.subr.mxu0 0.0
  %445 = vmatpush1.msra.mxu0 0.0
  %446 = vmatprep.subr.mxu0 0.0
  %447 = vmatpush1.msra.mxu0 0.0
  %448 = vmatprep.subr.mxu0 0.0
  %449 = vmatpush1.msra.mxu0 0.0
  %450 = vmatprep.subr.mxu0 0.0
  %451 = vmatpush1.msra.mxu0 0.0
  %452 = vmatprep.subr.mxu0 0.0
  %453 = vmatpush1.msra.mxu0 0.0
  %454 = vmatprep.subr.mxu0 0.0
  %455 = vmatpush1.msra.mxu0 0.0
  %456 = vmatprep.subr.mxu0 0.0
  %457 = vmatpush1.msra.mxu0 0.0
  %458 = vmatprep.subr.mxu0 0.0
  %459 = vmatpush1.msra.mxu0 0.0
  %460 = vmatprep.subr.mxu0 0.0
  %461 = vmatpush1.msra.mxu0 0.0
  %462 = vmatprep.subr.mxu0 0.0
  %463 = vmatpush1.msra.mxu0 %v431
  %464 = vmatprep.subr.mxu0 0.0
  %465 = vmatpush1.msra.mxu0 %v430
  %466 = vmatprep.subr.mxu0 0.0
  %467 = vmatpush1.msra.mxu0 %v429
  %468 = vmatprep.subr.mxu0 0.0
  %469 = vmatpush1.msra.mxu0 %v428
  %470 = vmatprep.subr.mxu0 0.0
  %471 = vmatpush1.msra.mxu0 %v427
  %472 = vmatprep.subr.mxu0 0.0
  %473 = vmatpush1.msra.mxu0 %v426
  %474 = vmatprep.subr.mxu0 0.0
  %475 = vmatpush2.msra.mxu0 0.0
  %476 = vmatprep.subr.mxu0 0.0
  %477 = vmatpush2.msra.mxu0 0.0
  %478 = vmatprep.subr.mxu0 0.0
  %479 = vmatpush2.msra.mxu0 0.0
  %480 = vmatprep.subr.mxu0 0.0
  %481 = vmatpush2.msra.mxu0 0.0
  %482 = vmatprep.subr.mxu0 0.0
  %483 = vmatpush2.msra.mxu0 0.0
  %484 = vmatprep.subr.mxu0 0.0
  %485 = vmatpush2.msra.mxu0 0.0
  %486 = vmatprep.subr.mxu0 0.0
  %487 = vmatpush2.msra.mxu0 0.0
  %488 = vmatprep.subr.mxu0 0.0
  %489 = vmatpush2.msra.mxu0 0.0
  %490 = vmatprep.subr.mxu0 0.0
  %491 = vmatpush2.msra.mxu0 0.0
  %492 = vmatprep.subr.mxu0 0.0
  %493 = vmatpush2.msra.mxu0 0.0
  %494 = vmatprep.subr.mxu0 0.0
  %495 = vmatpush2.msra.mxu0 0.0
  %496 = vmatprep.subr.mxu0 0.0
  %497 = vmatpush2.msra.mxu0 0.0
  %498 = vmatprep.subr.mxu0 0.0
  %499 = vmatpush2.msra.mxu0 0.0
  %500 = vmatprep.subr.mxu0 0.0
  %501 = vmatpush2.msra.mxu0 0.0
  %502 = vmatprep.subr.mxu0 0.0
  %503 = vmatpush2.msra.mxu0 0.0
  %504 = vmatprep.subr.mxu0 0.0
  %505 = vmatpush2.msra.mxu0 0.0
  %506 = vmatprep.mubr.f32.mxu0 0.0
  %507 = vmatmul.mubr.f32.gmra.mxu0 %v440
  %v508 = vpop.f32.mrf.mxu0
  %v509 = vadd.f32 %v437, %v508
  %v510 = vpop.f32.mrf.mxu0
  %511 = vdwg.mxu0
  %512 = vst [vmem:[%s5] sm:$0xff] %v509
  // Predicated region
  $region22: #{textcnn_forward.1} parent=0 // pred_check
    _
  $region23: #{textcnn_forward.1} parent=0 // pred_check_branch
    %514 = sbr.rel (0) target = $region25
  $region24: #{textcnn_forward.1} parent=0 // pred_region
    _
  $region25: #{textcnn_forward.1} parent=0 // pred_fallthru
    _
  // Predicated region
  $region26: #{textcnn_forward.1} parent=0 // pred_check
    _
  $region27: #{textcnn_forward.1} parent=0 // pred_check_branch
    %516 = sbr.rel (0) target = $region29
  $region28: #{textcnn_forward.1} parent=0 // pred_region
    _
  $region29: #{textcnn_forward.1} parent=0 // pred_fallthru
    _

</llo_original>
